<compile_context>
chip_gen: v7x
topology: tpu7x:2x2x1
jax: 0.10.0
libtpu: 0.0.40
codegen_flags: <defaults>
</compile_context>

<pallas_src>
import jax
import jax.numpy as jnp
from jax.experimental import pallas as pl
from jax.experimental.pallas import tpu as pltpu


def _affine_kernel(scale_ref, beta_ref, x_ref, o_ref):
    # scale/beta: (TR, 1); x/o: (TR, TL). Broadcast along lanes in the VPU.
    o_ref[...] = (scale_ref[...] * x_ref[...] + beta_ref[...]).astype(o_ref.dtype)


def _round_up(n, m):
    return ((n + m - 1) // m) * m


def featurewise_affine(x, text_embed, w1, b1, w2, b2, *, neg_slope=0.01):
    """x: (B, C, H, W) float32 NCHW; text_embed: (B, Cin) float32.

    Weights use PyTorch nn.Linear layout: w1 (2*Cin, Cin), b1 (2*Cin,),
    w2 (2*C, 2*Cin), b2 (2*C,).
    """
    B, C, H, W = x.shape
    HW = H * W

    # --- Tiny MLP hoisted to XLA: one batched matmul pair for all B rows. ---
    h = jnp.dot(text_embed, w1.T, preferred_element_type=jnp.float32) + b1
    h = jnp.where(h >= 0, h, neg_slope * h)                    # LeakyReLU(0.01)
    gb = jnp.dot(h, w2.T, preferred_element_type=jnp.float32) + b2   # (B, 2C)
    scale = (1.0 + gb[:, :C]).astype(x.dtype)                  # 1 + gamma, (B, C)
    beta = gb[:, C:].astype(x.dtype)                           # (B, C)

    # --- Flatten to 2D slabs for sublane/lane-dense tiling. ---
    R = B * C
    x2 = x.reshape(R, HW)
    scale2 = scale.reshape(R, 1)
    beta2 = beta.reshape(R, 1)

    # Lane tile: multiple of 128; row tile: multiple of 8.  Cap the per-block
    # footprint at ~2 MiB so in+out double buffers (~8 MiB) fit any scoped
    # VMEM default with headroom.
    TL = min(2048, _round_up(HW, 128))
    max_rows = max(8, ((2 * 1024 * 1024 // 4) // TL) // 8 * 8)
    TR = min(max_rows, _round_up(R, 8))

    R_pad = _round_up(R, TR)
    L_pad = _round_up(HW, TL)
    if R_pad != R or L_pad != HW:
        x2 = jnp.pad(x2, ((0, R_pad - R), (0, L_pad - HW)))
        scale2 = jnp.pad(scale2, ((0, R_pad - R), (0, 0)))
        beta2 = jnp.pad(beta2, ((0, R_pad - R), (0, 0)))

    grid = (R_pad // TR, L_pad // TL)

    out2 = pl.pallas_call(
        _affine_kernel,
        out_shape=jax.ShapeDtypeStruct((R_pad, L_pad), x.dtype),
        grid=grid,
        in_specs=[
            pl.BlockSpec((TR, 1), lambda r, l: (r, 0)),    # scale = 1 + gamma
            pl.BlockSpec((TR, 1), lambda r, l: (r, 0)),    # beta
            pl.BlockSpec((TR, TL), lambda r, l: (r, l)),   # x
        ],
        out_specs=pl.BlockSpec((TR, TL), lambda r, l: (r, l)),
        compiler_params=pltpu.CompilerParams(
            dimension_semantics=("parallel", "parallel")),
    )(scale2, beta2, x2)

    return out2[:R, :HW].reshape(B, C, H, W)


def _reference(x, text_embed, w1, b1, w2, b2):
    # Pure-JAX reference mirroring the PyTorch forward.
    t = text_embed[:, None, :]                                  # (B, 1, Cin)
    h = jnp.einsum("boi,ji->boj", t, w1) + b1                   # (B, 1, 2Cin)
    h = jnp.where(h >= 0, h, 0.01 * h)
    gb = jnp.einsum("boi,ji->boj", h, w2) + b2                  # (B, 1, 2Cout)
    gb = gb.reshape(x.shape[0], -1, 1, 1)
    gamma, beta = jnp.split(gb, 2, axis=1)
    return (1.0 + gamma) * x + beta


if __name__ == "__main__":
    # Module hyper-parameters (synthetic, deterministic init).
    in_channels = 8      # text-embedding dim
    out_channels = 4     # feature channels of x
    B, H, W = 2, 16, 16

    key = jax.random.PRNGKey(0)
    kx, kt, kw1, kb1, kw2, kb2 = jax.random.split(key, 6)

    x = jax.random.normal(kx, (B, out_channels, H, W), dtype=jnp.float32)
    text_embed = jax.random.normal(kt, (B, in_channels), dtype=jnp.float32)

    # PyTorch nn.Linear init: U(-1/sqrt(fan_in), 1/sqrt(fan_in)); weight (out, in).
    lim1 = 1.0 / (in_channels ** 0.5)
    w1 = jax.random.uniform(kw1, (2 * in_channels, in_channels),
                            minval=-lim1, maxval=lim1, dtype=jnp.float32)
    b1 = jax.random.uniform(kb1, (2 * in_channels,),
                            minval=-lim1, maxval=lim1, dtype=jnp.float32)
    lim2 = 1.0 / ((2 * in_channels) ** 0.5)
    w2 = jax.random.uniform(kw2, (2 * out_channels, 2 * in_channels),
                            minval=-lim2, maxval=lim2, dtype=jnp.float32)
    b2 = jax.random.uniform(kb2, (2 * out_channels,),
                            minval=-lim2, maxval=lim2, dtype=jnp.float32)

    out = featurewise_affine(x, text_embed, w1, b1, w2, b2)
    out = jax.block_until_ready(out)

    ref = _reference(x, text_embed, w1, b1, w2, b2)
    assert out.shape == x.shape and out.dtype == x.dtype
    assert jnp.allclose(out, ref, atol=1e-5, rtol=1e-5)

    print("KERNEL_OK")
</pallas_src>

<mosaic_0001>
module attributes {stable_mosaic.version = 11 : i64} {
  func.func @_affine_kernel(%arg0: i32, %arg1: i32, %arg2: memref<8x1xf32, #tpu.memory_space<vmem>>, %arg3: memref<8x1xf32, #tpu.memory_space<vmem>>, %arg4: memref<8x256xf32, #tpu.memory_space<vmem>>, %arg5: memref<8x256xf32, #tpu.memory_space<vmem>>) attributes {dimension_semantics = [#tpu.dimension_semantics<parallel>, #tpu.dimension_semantics<parallel>], iteration_bounds = array<i64: 1, 1>, scalar_prefetch = 0 : i64, scratch_operands = 0 : i64, tpu.core_type = #tpu.core_type<tc>, window_params = [{transform_indices = @transform_0, window_bounds = array<i64: 8, 1>}, {transform_indices = @transform_1, window_bounds = array<i64: 8, 1>}, {transform_indices = @transform_2, window_bounds = array<i64: 8, 256>}, {transform_indices = @transform_3, window_bounds = array<i64: 8, 256>}]} {
    %c0 = arith.constant 0 : index
    %c0_0 = arith.constant 0 : index
    %0 = vector.load %arg2[%c0, %c0_0] : memref<8x1xf32, #tpu.memory_space<vmem>>, vector<8x1xf32>
    %c0_1 = arith.constant 0 : index
    %c0_2 = arith.constant 0 : index
    %1 = vector.load %arg4[%c0_1, %c0_2] : memref<8x256xf32, #tpu.memory_space<vmem>>, vector<8x256xf32>
    %2 = vector.broadcast %0 : vector<8x1xf32> to vector<8x256xf32>
    %3 = arith.mulf %2, %1 : vector<8x256xf32>
    %c0_3 = arith.constant 0 : index
    %c0_4 = arith.constant 0 : index
    %4 = vector.load %arg3[%c0_3, %c0_4] : memref<8x1xf32, #tpu.memory_space<vmem>>, vector<8x1xf32>
    %5 = vector.broadcast %4 : vector<8x1xf32> to vector<8x256xf32>
    %6 = arith.addf %3, %5 : vector<8x256xf32>
    %c0_5 = arith.constant 0 : index
    %c0_6 = arith.constant 0 : index
    %7 = vector.load %arg5[%c0_5, %c0_6] : memref<8x256xf32, #tpu.memory_space<vmem>>, vector<8x256xf32>
    tpu.vector_store %arg5[%c0_5, %c0_6], %6 {strides = array<i32>} : memref<8x256xf32, #tpu.memory_space<vmem>>, vector<8x256xf32>,
    return
  }
  func.func @transform_0(%arg0: i32, %arg1: i32) -> (i32, i32) {
    %c0_i32 = arith.constant 0 : i32
    %c0_i32_0 = arith.constant 0 : i32
    return %arg0, %c0_i32 : i32, i32
  }
  func.func @transform_1(%arg0: i32, %arg1: i32) -> (i32, i32) {
    %c0_i32 = arith.constant 0 : i32
    %c0_i32_0 = arith.constant 0 : i32
    return %arg0, %c0_i32 : i32, i32
  }
  func.func @transform_2(%arg0: i32, %arg1: i32) -> (i32, i32) {
    %c0_i32 = arith.constant 0 : i32
    return %arg0, %arg1 : i32, i32
  }
  func.func @transform_3(%arg0: i32, %arg1: i32) -> (i32, i32) {
    %c0_i32 = arith.constant 0 : i32
    return %arg0, %arg1 : i32, i32
  }
}

</mosaic_0001>

<llo_original>
// kernel: tpu_custom_call.1
$region0: #{tpu_custom_call.1}
  #allocation0 [shape = 'u32[]', space=smem, size = 0x4, offset = 0x4, fixed_abs, tag = 'smem constant byte address 0x4 - core index']
  #allocation1 [shape = 'u32[144,128]{1,0:T(1,128)}', space=vmem, size = 0x12000, scoped, tag = 'internal scratch']
  %s0 = inlined_call_operand.vmem [shape: f32[8,1], index: 0, kind: input, shape index: {}]
  %s1 = inlined_call_operand.vmem [shape: f32[8,1], index: 1, kind: input, shape index: {}]
  %s2 = inlined_call_operand.vmem [shape: f32[8,256], index: 2, kind: input, shape index: {}]
  %s3 = inlined_call_operand.hbm [shape: f32[8,256], index: 3, kind: output, shape index: {}]
  %s4 = sld [smem:[#allocation0]]
  $region22: #{tpu_custom_call.1} parent=0
    _
  %s6 = ssub.s32 1, %s4
  %s7 = scalar_select 0, %s6, %s4
  $region1: #{tpu_custom_call.1} parent=0
    #allocation2 [shape = 'u8[8192]{0}', space=vmem, size = 0x2000, scoped, tag = 'output window, operand 0, single buffered']
    #allocation3 [shape = 's32[1]{0}', space=sflag, size = 0x4, scoped, tag = 'scoped memory for tpu_custom_call.1']
    %8 = vsyncpa [#allocation3], 0
    // Predicated region
    $region2: #{tpu_custom_call.1} parent=1 // pred_check
      _
    $region3: #{tpu_custom_call.1} parent=1 // pred_check_branch
      %10 = sbr.rel (0) target = $region5
    $region4: #{tpu_custom_call.1} parent=1 // pred_region
      _
    $region5: #{tpu_custom_call.1} parent=1 // pred_fallthru
      _
    // Predicated region
    $region6: #{tpu_custom_call.1} parent=1 // pred_check
      _
    $region7: #{tpu_custom_call.1} parent=1 // pred_check_branch
      %12 = sbr.rel (0) target = $region9
    $region8: #{tpu_custom_call.1} parent=1 // pred_region
      _
    $region9: #{tpu_custom_call.1} parent=1 // pred_fallthru
      _
    // Predicated region
    $region10: #{tpu_custom_call.1} parent=1 // pred_check
      _
    $region11: #{tpu_custom_call.1} parent=1 // pred_check_branch
      %14 = sbr.rel (0) target = $region13
    $region12: #{tpu_custom_call.1} parent=1 // pred_region
      _
    $region13: #{tpu_custom_call.1} parent=1 // pred_fallthru
      _
    %v15 = vld [vmem:[%s0] sm:$0xff]
    %v16 = vld [vmem:[%s2] sm:$0xff]
    %v17 = vld [vmem:[%s2 + $0x8] sm:$0xff]
    %19 = vset.pattern.permute.xlu0 0
    %20 = vperm.xlu0 %19, %v15
    %v21 = vpop.permute.xlu0 %20
    %v23 = vmul.f32 %v21, %v16
    %v24 = vmul.f32 %v21, %v17
    %v25 = vld [vmem:[%s1] sm:$0xff]
    %27 = vset.pattern.permute.xlu0 0
    %28 = vperm.xlu0 %27, %v25
    %v29 = vpop.permute.xlu0 %28
    %v31 = vadd.f32 %v23, %v29
    %v32 = vadd.f32 %v24, %v29
    %33 = vst [vmem:[#allocation2] sm:$0xff] %v31
    %34 = vst [vmem:[#allocation2 + $0x8] sm:$0xff] %v32
    // Predicated region
    $region14: #{tpu_custom_call.1} parent=1 // pred_check
      _
    $region15: #{tpu_custom_call.1} parent=1 // pred_check_branch
      %36 = sbr.rel (0) target = $region17
    $region16: #{tpu_custom_call.1} parent=1 // pred_region
      %s38 = ssub.s32 256, 256
      %39 = vsyncadd [#allocation3], %s38
      %s41 = sshll.u32 [#allocation2], 4
      %s42 = int_to_ptr.vmem [resolvable:$true] %s41
      %44 = dma.vmem_to_hbm [thread:$0]  %s42, 256, %s3, [#allocation3]
    $region17: #{tpu_custom_call.1} parent=1 // pred_fallthru
      _
    // Predicated region
    $region18: #{tpu_custom_call.1} parent=1 // pred_check
      _
    $region19: #{tpu_custom_call.1} parent=1 // pred_check_branch
      %46 = sbr.rel (0) target = $region21
    $region20: #{tpu_custom_call.1} parent=1 // pred_region
      %47 = dma.done [#allocation3], 256
    $region21: #{tpu_custom_call.1} parent=1 // pred_fallthru
      _
    %48 = vsyncpa [#allocation3], 1

</llo_original>
